<compile_context>
chip_gen: v7x
topology: tpu7x:2x2x1
jax: 0.10.0
libtpu: 0.0.40
codegen_flags: <defaults>
</compile_context>

<pallas_src>
import jax
import jax.numpy as jnp
from jax.experimental import pallas as pl
from jax.experimental.pallas import tpu as pltpu

NUM_CLASSES = 7
IN_FEATURES = 32   # hidden size fed to each sub-model head
BATCH = 2

LANE = 128         # TPU lane width (last-dim tile)
SUBLANE = 8        # TPU sublane width (second-to-last-dim tile)


def ensemble_kernel(x_ref, w_ref, b_ref, out_ref):
    # Single fused matmul: (tm, 96) @ (96, 128) + (1, 128) broadcast-add.
    out_ref[...] = (
        jnp.dot(x_ref[...], w_ref[...], preferred_element_type=jnp.float32)
        + b_ref[...]
    ).astype(out_ref.dtype)


def _round_up(x, m):
    return ((x + m - 1) // m) * m


def fold_params(params):
    """Fold the 3 heads + classifier into one (3*IN_FEATURES, 128) weight and a
    (1, 128) bias (lane dims zero-padded from 7 -> 128). Pure wrapper glue."""
    wcls = params["wcls"]                              # (7, 21), PyTorch (out, in)
    wc1 = wcls[:, 0:NUM_CLASSES].T                     # (7, 7)
    wc2 = wcls[:, NUM_CLASSES:2 * NUM_CLASSES].T       # (7, 7)
    wc3 = wcls[:, 2 * NUM_CLASSES:3 * NUM_CLASSES].T   # (7, 7)

    w_fused = jnp.concatenate([
        params["wa"].T @ wc1,                          # (32, 7)
        params["wb"].T @ wc2,                          # (32, 7)
        params["wc"].T @ wc3,                          # (32, 7)
    ], axis=0)                                         # (96, 7)

    b_eff = (params["ba"] @ wc1 + params["bb"] @ wc2
             + params["bc"] @ wc3 + params["bcls"])    # (7,)

    # Zero-pad the lane dim to 128 so the kernel's output store is lane-dense.
    w_pad = jnp.pad(w_fused, ((0, 0), (0, LANE - NUM_CLASSES)))
    b_pad = jnp.pad(b_eff, (0, LANE - NUM_CLASSES)).reshape(1, LANE)
    return w_pad, b_pad


def ensemble_forward(x1, x2, x3, params, *, block_m=256):
    """x1/x2/x3: (B, IN_FEATURES) float32. Returns (B, NUM_CLASSES) float32."""
    B = x1.shape[0]
    K = 3 * IN_FEATURES

    w_pad, b_pad = fold_params(params)

    # Wrapper glue: one concat outside the kernel (no in-kernel lane shuffles).
    x_cat = jnp.concatenate([x1, x2, x3], axis=1).astype(jnp.float32)   # (B, 96)

    # Batch tile: at most block_m rows, always a multiple of 8 sublanes.
    tm = min(block_m, _round_up(B, SUBLANE))
    b_rows = _round_up(B, tm)
    if b_rows != B:
        x_cat = jnp.pad(x_cat, ((0, b_rows - B), (0, 0)))
    grid = (b_rows // tm,)

    out = pl.pallas_call(
        ensemble_kernel,
        out_shape=jax.ShapeDtypeStruct((b_rows, LANE), jnp.float32),
        grid_spec=pltpu.PrefetchScalarGridSpec(
            num_scalar_prefetch=0,
            grid=grid,
            in_specs=[
                pl.BlockSpec((tm, K), lambda i: (i, 0)),      # activations, batch-tiled
                pl.BlockSpec((K, LANE), lambda i: (0, 0)),    # fused weight, VMEM-resident
                pl.BlockSpec((1, LANE), lambda i: (0, 0)),    # fused bias, VMEM-resident
            ],
            out_specs=pl.BlockSpec((tm, LANE), lambda i: (i, 0)),
        ),
        compiler_params=pltpu.CompilerParams(
            dimension_semantics=("parallel",),  # shard batch tiles across TCs (v7x)
        ),
    )(x_cat, w_pad, b_pad)

    # Strip batch padding and the lane padding (only first 7 lanes are valid).
    return out[:B, :NUM_CLASSES]


def init_params(key):
    ks = jax.random.split(key, 8)
    scale_head = 1.0 / jnp.sqrt(IN_FEATURES)
    scale_cls = 1.0 / jnp.sqrt(3 * NUM_CLASSES)
    return {
        "wa": jax.random.uniform(ks[0], (NUM_CLASSES, IN_FEATURES),
                                 jnp.float32, -scale_head, scale_head),
        "ba": jax.random.uniform(ks[1], (NUM_CLASSES,),
                                 jnp.float32, -scale_head, scale_head),
        "wb": jax.random.uniform(ks[2], (NUM_CLASSES, IN_FEATURES),
                                 jnp.float32, -scale_head, scale_head),
        "bb": jax.random.uniform(ks[3], (NUM_CLASSES,),
                                 jnp.float32, -scale_head, scale_head),
        "wc": jax.random.uniform(ks[4], (NUM_CLASSES, IN_FEATURES),
                                 jnp.float32, -scale_head, scale_head),
        "bc": jax.random.uniform(ks[5], (NUM_CLASSES,),
                                 jnp.float32, -scale_head, scale_head),
        "wcls": jax.random.uniform(ks[6], (NUM_CLASSES, 3 * NUM_CLASSES),
                                   jnp.float32, -scale_cls, scale_cls),
        "bcls": jax.random.uniform(ks[7], (NUM_CLASSES,),
                                   jnp.float32, -scale_cls, scale_cls),
    }


def reference_forward(x1, x2, x3, p):
    """Unfused reference matching the PyTorch module exactly."""
    y1 = x1 @ p["wa"].T + p["ba"]
    y2 = x2 @ p["wb"].T + p["bb"]
    y3 = x3 @ p["wc"].T + p["bc"]
    cat = jnp.concatenate([y1, y2, y3], axis=1)
    return cat @ p["wcls"].T + p["bcls"]


if __name__ == "__main__":
    key = jax.random.PRNGKey(0)
    k_params, k1, k2, k3 = jax.random.split(key, 4)
    params = init_params(k_params)

    x1 = jax.random.normal(k1, (BATCH, IN_FEATURES), jnp.float32)
    x2 = jax.random.normal(k2, (BATCH, IN_FEATURES), jnp.float32)
    x3 = jax.random.normal(k3, (BATCH, IN_FEATURES), jnp.float32)

    out = ensemble_forward(x1, x2, x3, params)
    out = jax.block_until_ready(out)

    ref = reference_forward(x1, x2, x3, params)
    assert out.shape == (BATCH, NUM_CLASSES)
    # Weight folding reorders f32 accumulation slightly; 1e-5 still holds at
    # these magnitudes.
    assert jnp.allclose(out, ref, atol=1e-5, rtol=1e-5), (
        float(jnp.max(jnp.abs(out - ref))))

    print("KERNEL_OK")
</pallas_src>

<mosaic_0001>
module attributes {stable_mosaic.version = 11 : i64} {
  func.func @ensemble_kernel(%arg0: i32, %arg1: memref<8x96xf32, #tpu.memory_space<vmem>>, %arg2: memref<96x128xf32, #tpu.memory_space<vmem>>, %arg3: memref<1x128xf32, #tpu.memory_space<vmem>>, %arg4: memref<8x128xf32, #tpu.memory_space<vmem>>) attributes {dimension_semantics = [#tpu.dimension_semantics<parallel>], iteration_bounds = array<i64: 1>, scalar_prefetch = 0 : i64, scratch_operands = 0 : i64, tpu.core_type = #tpu.core_type<tc>, window_params = [{transform_indices = @transform_0, window_bounds = array<i64: 8, 96>}, {pipeline_mode = #tpu.pipeline_mode<synchronous>, transform_indices = @transform_1, window_bounds = array<i64: 96, 128>}, {pipeline_mode = #tpu.pipeline_mode<synchronous>, transform_indices = @transform_2, window_bounds = array<i64: 1, 128>}, {transform_indices = @transform_3, window_bounds = array<i64: 8, 128>}]} {
    %c0 = arith.constant 0 : index
    %c0_0 = arith.constant 0 : index
    %0 = vector.load %arg1[%c0, %c0_0] : memref<8x96xf32, #tpu.memory_space<vmem>>, vector<8x96xf32>
    %c0_1 = arith.constant 0 : index
    %c0_2 = arith.constant 0 : index
    %1 = vector.load %arg2[%c0_1, %c0_2] : memref<96x128xf32, #tpu.memory_space<vmem>>, vector<96x128xf32>
    %cst = arith.constant dense<0.000000e+00> : vector<8x128xf32>
    %2 = tpu.matmul %0, %1, %cst {dimension_numbers = #tpu.dot_dimension_numbers<[1], [0], [0], [1], [0, 0, 1, 1], [], []>} : vector<8x96xf32>, vector<96x128xf32>, vector<8x128xf32> -> vector<8x128xf32>
    %c0_3 = arith.constant 0 : index
    %c0_4 = arith.constant 0 : index
    %3 = vector.load %arg3[%c0_3, %c0_4] : memref<1x128xf32, #tpu.memory_space<vmem>>, vector<1x128xf32>
    %4 = vector.broadcast %3 : vector<1x128xf32> to vector<8x128xf32>
    %5 = arith.addf %2, %4 : vector<8x128xf32>
    %c0_5 = arith.constant 0 : index
    %c0_6 = arith.constant 0 : index
    %6 = vector.load %arg4[%c0_5, %c0_6] : memref<8x128xf32, #tpu.memory_space<vmem>>, vector<8x128xf32>
    tpu.vector_store %arg4[%c0_5, %c0_6], %5 {strides = array<i32>} : memref<8x128xf32, #tpu.memory_space<vmem>>, vector<8x128xf32>,
    return
  }
  func.func @transform_0(%arg0: i32) -> (i32, i32) {
    %c0_i32 = arith.constant 0 : i32
    %c0_i32_0 = arith.constant 0 : i32
    return %arg0, %c0_i32 : i32, i32
  }
  func.func @transform_1(%arg0: i32) -> (i32, i32) {
    %c0_i32 = arith.constant 0 : i32
    %c0_i32_0 = arith.constant 0 : i32
    %c0_i32_1 = arith.constant 0 : i32
    return %c0_i32, %c0_i32_0 : i32, i32
  }
  func.func @transform_2(%arg0: i32) -> (i32, i32) {
    %c0_i32 = arith.constant 0 : i32
    %c0_i32_0 = arith.constant 0 : i32
    %c0_i32_1 = arith.constant 0 : i32
    return %c0_i32, %c0_i32_0 : i32, i32
  }
  func.func @transform_3(%arg0: i32) -> (i32, i32) {
    %c0_i32 = arith.constant 0 : i32
    %c0_i32_0 = arith.constant 0 : i32
    return %arg0, %c0_i32 : i32, i32
  }
}

</mosaic_0001>

<llo_original>
// kernel: tpu_custom_call.1
$region0: #{tpu_custom_call.1}
  #allocation0 [shape = 'u32[]', space=smem, size = 0x4, offset = 0x4, fixed_abs, tag = 'smem constant byte address 0x4 - core index']
  #allocation1 [shape = 'u32[144,128]{1,0:T(1,128)}', space=vmem, size = 0x12000, scoped, tag = 'internal scratch']
  %s0 = inlined_call_operand.hbm [shape: f32[8,96], index: 0, kind: input, shape index: {}]
  %s1 = inlined_call_operand.hbm [shape: f32[96,128], index: 1, kind: input, shape index: {}]
  %s2 = inlined_call_operand.vmem [shape: f32[1,128], index: 2, kind: input, shape index: {}]
  %s3 = inlined_call_operand.hbm [shape: f32[8,128], index: 3, kind: output, shape index: {}]
  %s4 = sld [smem:[#allocation0]]
  $region30: #{tpu_custom_call.1} parent=0
    _
  %s6 = ssub.s32 1, %s4
  %s7 = scalar_select 0, %s6, %s4
  $region1: #{tpu_custom_call.1} parent=0
    #allocation2 [shape = 'u8[4096]{0}', space=vmem, size = 0x1000, scoped, tag = 'input window, operand 0, single buffered']
    #allocation3 [shape = 's32[1]{0}', space=sflag, size = 0x4, scoped, tag = 'scoped memory for tpu_custom_call.1']
    #allocation4 [shape = 's32[1]{0}', space=sflag, size = 0x4, scoped, tag = 'scoped memory for tpu_custom_call.1']
    #allocation5 [shape = 'u8[49152]{0}', space=vmem, size = 0xc000, scoped, tag = 'input window, operand 1, single buffered']
    #allocation6 [shape = 's32[1]{0}', space=sflag, size = 0x4, scoped, tag = 'scoped memory for tpu_custom_call.1']
    #allocation7 [shape = 'u8[4096]{0}', space=vmem, size = 0x1000, scoped, tag = 'output window, operand 0, single buffered']
    %8 = vsyncpa [#allocation3], 0
    %9 = vsyncpa [#allocation6], 0
    %10 = vsyncpa [#allocation4], 0
    // Predicated region
    $region2: #{tpu_custom_call.1} parent=1 // pred_check
      _
    $region3: #{tpu_custom_call.1} parent=1 // pred_check_branch
      %12 = sbr.rel (0) target = $region5
    $region4: #{tpu_custom_call.1} parent=1 // pred_region
      %s14 = ssub.s32 128, 128
      %15 = vsyncadd [#allocation3], %s14
      %s17 = sshll.u32 [#allocation2], 4
      %s18 = int_to_ptr.vmem [resolvable:$true] %s17
      %20 = dma.hbm_to_vmem [thread:$0]  %s0, 128, %s18, [#allocation3]
    $region5: #{tpu_custom_call.1} parent=1 // pred_fallthru
      _
    // Predicated region
    $region6: #{tpu_custom_call.1} parent=1 // pred_check
      _
    $region7: #{tpu_custom_call.1} parent=1 // pred_check_branch
      %22 = sbr.rel (0) target = $region9
    $region8: #{tpu_custom_call.1} parent=1 // pred_region
      %s24 = ssub.s32 1536, 1536
      %25 = vsyncadd [#allocation6], %s24
      %s26 = sshll.u32 [#allocation5], 4
      %s27 = int_to_ptr.vmem [resolvable:$true] %s26
      %32 = dma.hbm_to_vmem [thread:$0]  %s1, 1536, %s27, [#allocation6], 128, 128, 8
    $region9: #{tpu_custom_call.1} parent=1 // pred_fallthru
      _
    // Predicated region
    $region10: #{tpu_custom_call.1} parent=1 // pred_check
      _
    $region11: #{tpu_custom_call.1} parent=1 // pred_check_branch
      %34 = sbr.rel (0) target = $region13
    $region12: #{tpu_custom_call.1} parent=1 // pred_region
      _
    $region13: #{tpu_custom_call.1} parent=1 // pred_fallthru
      _
    // Predicated region
    $region14: #{tpu_custom_call.1} parent=1 // pred_check
      _
    $region15: #{tpu_custom_call.1} parent=1 // pred_check_branch
      %36 = sbr.rel (0) target = $region17
    $region16: #{tpu_custom_call.1} parent=1 // pred_region
      %37 = dma.done [#allocation3], 128
    $region17: #{tpu_custom_call.1} parent=1 // pred_fallthru
      _
    // Predicated region
    $region18: #{tpu_custom_call.1} parent=1 // pred_check
      _
    $region19: #{tpu_custom_call.1} parent=1 // pred_check_branch
      %39 = sbr.rel (0) target = $region21
    $region20: #{tpu_custom_call.1} parent=1 // pred_region
      %40 = dma.done [#allocation6], 1536
    $region21: #{tpu_custom_call.1} parent=1 // pred_fallthru
      _
    %v41 = vld [vmem:[#allocation2] sm:$0xff]
    %v42 = vld [vmem:[#allocation5] sm:$0xff]
    %v43 = vld [vmem:[#allocation5 + $0x8] sm:$0xff]
    %v44 = vld [vmem:[#allocation5 + $0x10] sm:$0xff]
    %v45 = vld [vmem:[#allocation5 + $0x18] sm:$0xff]
    %v46 = vld [vmem:[#allocation5 + $0x20] sm:$0xff]
    %v47 = vld [vmem:[#allocation5 + $0x28] sm:$0xff]
    %v48 = vld [vmem:[#allocation5 + $0x30] sm:$0xff]
    %v49 = vld [vmem:[#allocation5 + $0x38] sm:$0xff]
    %v50 = vld [vmem:[#allocation5 + $0x40] sm:$0xff]
    %v51 = vld [vmem:[#allocation5 + $0x48] sm:$0xff]
    %v52 = vld [vmem:[#allocation5 + $0x50] sm:$0xff]
    %v53 = vld [vmem:[#allocation5 + $0x58] sm:$0xff]
    %v54 = vld [vmem:[%s2] sm:$0x1]
    %v56 = vlaneseq
    %v57 = vshrl.u32 %v56, 7
    %v58 = vsub.s32 0, %v57
    %v59 = vrot.slane %v54, %v58
    %vm61 = vcmask 785408
    %v63 = vsel %vm61, %v41, 0
    %65 = vmatprep.subr.mxu0 0.0
    %66 = vmatpush1.msra.mxu0 %v42
    %67 = vmatprep.subr.mxu0 0.0
    %68 = vmatpush1.msra.mxu0 %v43
    %69 = vmatprep.subr.mxu0 0.0
    %70 = vmatpush1.msra.mxu0 %v44
    %71 = vmatprep.subr.mxu0 0.0
    %72 = vmatpush1.msra.mxu0 %v45
    %73 = vmatprep.subr.mxu0 0.0
    %74 = vmatpush1.msra.mxu0 %v46
    %75 = vmatprep.subr.mxu0 0.0
    %76 = vmatpush1.msra.mxu0 %v47
    %77 = vmatprep.subr.mxu0 0.0
    %78 = vmatpush1.msra.mxu0 %v48
    %79 = vmatprep.subr.mxu0 0.0
    %80 = vmatpush1.msra.mxu0 %v49
    %81 = vmatprep.subr.mxu0 0.0
    %82 = vmatpush1.msra.mxu0 %v50
    %83 = vmatprep.subr.mxu0 0.0
    %84 = vmatpush1.msra.mxu0 %v51
    %85 = vmatprep.subr.mxu0 0.0
    %86 = vmatpush1.msra.mxu0 %v52
    %87 = vmatprep.subr.mxu0 0.0
    %88 = vmatpush1.msra.mxu0 %v53
    %89 = vmatprep.subr.mxu0 0.0
    %90 = vmatpush1.msra.mxu0 0.0
    %91 = vmatprep.subr.mxu0 0.0
    %92 = vmatpush1.msra.mxu0 0.0
    %93 = vmatprep.subr.mxu0 0.0
    %94 = vmatpush1.msra.mxu0 0.0
    %95 = vmatprep.subr.mxu0 0.0
    %96 = vmatpush1.msra.mxu0 0.0
    %97 = vmatprep.subr.mxu0 0.0
    %98 = vmatpush1.msra.mxu0 0.0
    %99 = vmatprep.subr.mxu0 0.0
    %100 = vmatpush1.msra.mxu0 0.0
    %101 = vmatprep.subr.mxu0 0.0
    %102 = vmatpush1.msra.mxu0 0.0
    %103 = vmatprep.subr.mxu0 0.0
    %104 = vmatpush1.msra.mxu0 0.0
    %105 = vmatprep.subr.mxu0 0.0
    %106 = vmatpush1.msra.mxu0 0.0
    %107 = vmatprep.subr.mxu0 0.0
    %108 = vmatpush1.msra.mxu0 0.0
    %109 = vmatprep.subr.mxu0 0.0
    %110 = vmatpush1.msra.mxu0 0.0
    %111 = vmatprep.subr.mxu0 0.0
    %112 = vmatpush1.msra.mxu0 0.0
    %113 = vmatprep.subr.mxu0 0.0
    %114 = vmatpush1.msra.mxu0 0.0
    %115 = vmatprep.subr.mxu0 0.0
    %116 = vmatpush1.msra.mxu0 0.0
    %117 = vmatprep.subr.mxu0 0.0
    %118 = vmatpush1.msra.mxu0 0.0
    %119 = vmatprep.subr.mxu0 0.0
    %120 = vmatpush1.msra.mxu0 0.0
    %121 = vmatprep.subr.mxu0 0.0
    %122 = vmatpush1.msra.mxu0 0.0
    %123 = vmatprep.subr.mxu0 0.0
    %124 = vmatpush1.msra.mxu0 0.0
    %125 = vmatprep.subr.mxu0 0.0
    %126 = vmatpush1.msra.mxu0 0.0
    %127 = vmatprep.subr.mxu0 0.0
    %128 = vmatpush1.msra.mxu0 0.0
    %129 = vmatprep.mubr.f32.mxu0 0.0
    %130 = vmatmul.mubr.f32.gmra.mrb[0].mxu0 %v63
    %v131 = vpop.f32.mrb[0].mxu0
    %v132 = vadd.f32 %v59, %v131
    %v133 = vpop.f32.mrb[0].mxu0
    %134 = vdwg.mxu0
    %135 = vst [vmem:[#allocation7] sm:$0xff] %v132
    // Predicated region
    $region22: #{tpu_custom_call.1} parent=1 // pred_check
      _
    $region23: #{tpu_custom_call.1} parent=1 // pred_check_branch
      %137 = sbr.rel (0) target = $region25
    $region24: #{tpu_custom_call.1} parent=1 // pred_region
      %s139 = ssub.s32 128, 128
      %140 = vsyncadd [#allocation4], %s139
      %s142 = sshll.u32 [#allocation7], 4
      %s143 = int_to_ptr.vmem [resolvable:$true] %s142
      %145 = dma.vmem_to_hbm [thread:$0]  %s143, 128, %s3, [#allocation4]
    $region25: #{tpu_custom_call.1} parent=1 // pred_fallthru
      _
    // Predicated region
    $region26: #{tpu_custom_call.1} parent=1 // pred_check
      _
    $region27: #{tpu_custom_call.1} parent=1 // pred_check_branch
      %147 = sbr.rel (0) target = $region29
    $region28: #{tpu_custom_call.1} parent=1 // pred_region
      %148 = dma.done [#allocation4], 128
    $region29: #{tpu_custom_call.1} parent=1 // pred_fallthru
      _
    %149 = vsyncpa [#allocation3], 1
    %150 = vsyncpa [#allocation6], 1
    %151 = vsyncpa [#allocation4], 1

</llo_original>
